<compile_context>
chip_gen: v7x
topology: tpu7x:2x2x1
jax: 0.10.0
libtpu: 0.0.40
codegen_flags: <defaults>
</compile_context>

<pallas_src>
import numpy as np
import jax
import jax.numpy as jnp
from jax import lax
from jax.experimental import pallas as pl
from jax.experimental.pallas import tpu as pltpu

COLLISION_PENALTY = 5.0

# Packed-slab row layout (per chunk: 24 components x 8 sub-batch rows, TB lanes):
#   component  0.. 2 : center_1 (x, y, z)
#   component  3.. 5 : center_2 (x, y, z)
#   component  6..14 : scale_1, row-major (s1[j, k] -> component 6 + 3*j + k)
#   component 15..23 : scale_2, row-major (s2[j, k] -> component 15 + 3*j + k)
# Pair index = chunk * (8*TB) + sub * TB + lane.


def _collision_kernel(x_ref, out_ref):
    def slab(c):  # (8, TB) slab: component c for 8*TB pairs (sublane+lane dense)
        return x_ref[8 * c:8 * (c + 1), :]

    c1 = [slab(k) for k in range(3)]
    c2 = [slab(3 + k) for k in range(3)]
    s1 = [[slab(6 + 3 * j + k) for k in range(3)] for j in range(3)]
    s2 = [[slab(15 + 3 * j + k) for k in range(3)] for j in range(3)]

    def dot3(a, b):
        return a[0] * b[0] + a[1] * b[1] + a[2] * b[2]

    # Box-2 Gram matrix is symmetric: hoist the 6 unique dot products out of the
    # per-axis loop instead of recomputing 9 inside r2 (+ diag reuse for ||u||^2).
    g2 = [[None] * 3 for _ in range(3)]
    for j in range(3):
        for a in range(j, 3):
            v = dot3(s2[j], s2[a])
            g2[j][a] = v
            g2[a][j] = v

    overlaps = []
    for a in range(3):
        u = s2[a]                       # unnormalized face axis a of box 2
        nsq = g2[a][a]
        # 1/||u|| on the EUP; zero rows are guarded (reference would NaN there).
        inv_n = jnp.where(nsq > 0.0, lax.rsqrt(nsq), 0.0)

        d1 = dot3(c1, u)                # center projections (unscaled)
        d2 = dot3(c2, u)
        # half-extent of each box along u == spread of the 8 signed corners
        r1 = sum(jnp.abs(dot3(s1[j], u)) for j in range(3))
        r2 = sum(jnp.abs(g2[j][a]) for j in range(3))

        max_min = jnp.maximum(d1 - r1, d2 - r2)     # max of per-box minima
        min_max = jnp.minimum(d1 + r1, d2 + r2)     # min of per-box maxima
        overlaps.append((max_min - min_max) * inv_n)

    ov0, ov1, ov2 = overlaps
    separated = (ov0 >= 0.0) | (ov1 >= 0.0) | (ov2 >= 0.0)
    max_ov = jnp.maximum(jnp.maximum(ov0, ov1), ov2)
    # Dense (8, TB) store: 8*TB real penalties, lane-dense & unmasked.
    out_ref[...] = jnp.where(separated, 0.0, max_ov * (-COLLISION_PENALTY))


def _pick_tb(batch: int) -> int:
    """Lane-tile selection: large enough to amortize per-step overhead (up to
    2048 lanes -> 1.5 MiB input block), but capped so the grid keeps >= 2 steps
    when the batch allows it (both v7x TensorCores get work)."""
    lanes_needed = max(1, -(-batch // 8))
    tb = -(-lanes_needed // 128) * 128
    if tb > 128:
        tb = min(2048, -(-(tb // 2) // 128) * 128)
    return tb


def pack_inputs(center_1, scale_1, center_2, scale_2, tb):
    """Pack (B,3)/(B,3,3) operands into the (n_chunks, 192, tb) kernel slab."""
    B = center_1.shape[0]
    chunk = 8 * tb
    n_chunks = -(-B // chunk)
    Bp = n_chunks * chunk

    comp = jnp.concatenate(
        [
            center_1.astype(jnp.float32).T,                # (3, B)
            center_2.astype(jnp.float32).T,                # (3, B)
            scale_1.astype(jnp.float32).reshape(B, 9).T,   # (9, B)
            scale_2.astype(jnp.float32).reshape(B, 9).T,   # (9, B)
        ],
        axis=0,
    )                                                       # (24, B)
    if Bp != B:
        comp = jnp.pad(comp, ((0, 0), (0, Bp - B)))         # padded pairs -> penalty 0
    packed = (comp.reshape(24, n_chunks, 8, tb)
                  .transpose(1, 0, 2, 3)
                  .reshape(n_chunks, 24 * 8, tb))
    return packed


def collision_penalty_packed(packed):
    """packed: (n_chunks, 192, tb) f32 slab. Returns (n_chunks*8*tb,) penalties."""
    n_chunks, rows, tb = packed.shape
    assert rows == 24 * 8
    out = pl.pallas_call(
        _collision_kernel,
        out_shape=jax.ShapeDtypeStruct((n_chunks, 8, tb), jnp.float32),
        grid=(n_chunks,),
        in_specs=[pl.BlockSpec((None, 24 * 8, tb), lambda i: (i, 0, 0))],
        out_specs=pl.BlockSpec((None, 8, tb), lambda i: (i, 0, 0)),
        compiler_params=pltpu.CompilerParams(
            dimension_semantics=("parallel",)),
    )(packed)
    # Pair order matches original batch order, so the unpack is a plain reshape.
    return out.reshape(-1)


def collision_penalty_batch(center_1, scale_1, center_2, scale_2, *, tb=None):
    """center_i: (B, 3), scale_i: (B, 3, 3). Returns (B,) float32 penalties."""
    B = center_1.shape[0]
    if tb is None:
        tb = _pick_tb(B)
    packed = pack_inputs(center_1, scale_1, center_2, scale_2, tb)
    return collision_penalty_packed(packed)[:B]


def collision_penalty(center_1, scale_1, center_2, scale_2):
    """Single-pair API matching the original module: returns a (1,) tensor."""
    out = collision_penalty_batch(
        center_1[None], scale_1[None], center_2[None], scale_2[None])
    return out.reshape(1)


# ---------------- numpy references (literal transcription of the module) ----------------
_CORNER_SIGNS = np.array(
    [[-1, -1, -1], [1, -1, -1], [-1, 1, -1], [1, 1, -1],
     [-1, -1, 1], [1, -1, 1], [-1, 1, 1], [1, 1, 1]],
    dtype=np.float32,
)


def _reference_single(c1, s1, c2, s2):
    corners1 = c1[None, :] + _CORNER_SIGNS @ s1
    corners2 = c2[None, :] + _CORNER_SIGNS @ s2
    fn = s2 / np.linalg.norm(s2, axis=1, keepdims=True)
    p1 = fn @ corners1.T
    p2 = fn @ corners2.T
    maximum_mins = np.maximum(p1.min(1), p2.min(1))
    minimum_maxes = np.minimum(p1.max(1), p2.max(1))
    overlap = maximum_mins - minimum_maxes
    if (overlap >= 0).any():
        return np.float32(0.0)
    return np.float32(overlap.max() * -1.0 * COLLISION_PENALTY)


def _reference_batch(c1, s1, c2, s2):
    corners1 = c1[:, None, :] + np.einsum('cj,bjk->bck', _CORNER_SIGNS, s1)
    corners2 = c2[:, None, :] + np.einsum('cj,bjk->bck', _CORNER_SIGNS, s2)
    fn = s2 / np.linalg.norm(s2, axis=2, keepdims=True)
    p1 = np.einsum('baj,bcj->bac', fn, corners1)    # (B, 3, 8)
    p2 = np.einsum('baj,bcj->bac', fn, corners2)
    maximum_mins = np.maximum(p1.min(2), p2.min(2))
    minimum_maxes = np.minimum(p1.max(2), p2.max(2))
    overlap = maximum_mins - minimum_maxes           # (B, 3)
    separated = (overlap >= 0).any(1)
    return np.where(separated, 0.0,
                    overlap.max(1) * -1.0 * COLLISION_PENALTY).astype(np.float32)


if __name__ == "__main__":
    key = jax.random.PRNGKey(0)
    k_small, k_big = jax.random.split(key, 2)

    def make_boxes(keys, B):
        ka, kb, kc, kd, ke, kf = keys
        center_1 = jax.random.normal(ka, (B, 3), jnp.float32)
        center_2 = center_1 + jax.random.normal(kb, (B, 3), jnp.float32)
        scale_1 = (jax.vmap(jnp.diag)(0.5 + jax.random.uniform(kc, (B, 3), jnp.float32))
                   + 0.05 * jax.random.normal(ke, (B, 3, 3), jnp.float32))
        scale_2 = (jax.vmap(jnp.diag)(0.5 + jax.random.uniform(kd, (B, 3), jnp.float32))
                   + 0.05 * jax.random.normal(kf, (B, 3, 3), jnp.float32))
        return center_1, scale_1, center_2, scale_2

    # --- small batch: check against a literal per-pair transcription ---
    B = 8
    c1, s1, c2, s2 = make_boxes(jax.random.split(k_small, 6), B)
    out = jax.block_until_ready(jax.jit(collision_penalty_batch)(c1, s1, c2, s2))
    ref = np.array([_reference_single(np.asarray(c1[i]), np.asarray(s1[i]),
                                      np.asarray(c2[i]), np.asarray(s2[i]))
                    for i in range(B)], dtype=np.float32)
    assert out.shape == (B,) and out.dtype == jnp.float32
    assert np.allclose(np.asarray(out), ref, atol=1e-4, rtol=1e-4), (out, ref)

    # --- larger batch: exercises multi-chunk grid (2 steps) + lane padding ---
    B2 = 2100
    c1b, s1b, c2b, s2b = make_boxes(jax.random.split(k_big, 6), B2)
    out2 = jax.block_until_ready(jax.jit(collision_penalty_batch)(c1b, s1b, c2b, s2b))
    ref2 = _reference_batch(np.asarray(c1b), np.asarray(s1b),
                            np.asarray(c2b), np.asarray(s2b))
    assert out2.shape == (B2,) and out2.dtype == jnp.float32
    assert np.allclose(np.asarray(out2), ref2, atol=1e-4, rtol=1e-4)

    # --- single-pair wrapper (original module returns a (1,) tensor) ---
    single = jax.block_until_ready(
        jax.jit(collision_penalty)(c1[0], s1[0], c2[0], s2[0]))
    assert single.shape == (1,) and single.dtype == jnp.float32
    assert np.allclose(np.asarray(single), ref[0], atol=1e-4, rtol=1e-4)

    print("KERNEL_OK")
</pallas_src>

<mosaic_0001>
module attributes {stable_mosaic.version = 11 : i64} {
  func.func @_collision_kernel(%arg0: i32, %arg1: memref<1x192x128xf32, #tpu.memory_space<vmem>>, %arg2: memref<1x8x128xf32, #tpu.memory_space<vmem>>) attributes {dimension_semantics = [#tpu.dimension_semantics<parallel>], iteration_bounds = array<i64: 1>, scalar_prefetch = 0 : i64, scratch_operands = 0 : i64, tpu.core_type = #tpu.core_type<tc>, window_params = [{transform_indices = @transform_0, window_bounds = array<i64: 1, 192, 128>}, {transform_indices = @transform_1, window_bounds = array<i64: 1, 8, 128>}]} {
    %c0 = arith.constant 0 : index
    %c0_0 = arith.constant 0 : index
    %c0_1 = arith.constant 0 : index
    %0 = vector.load %arg1[%c0, %c0_0, %c0_1] : memref<1x192x128xf32, #tpu.memory_space<vmem>>, vector<1x8x128xf32>
    %1 = vector.shape_cast %0 : vector<1x8x128xf32> to vector<8x128xf32>
    %c0_2 = arith.constant 0 : index
    %c8 = arith.constant 8 : index
    %c0_3 = arith.constant 0 : index
    %2 = vector.load %arg1[%c0_2, %c8, %c0_3] : memref<1x192x128xf32, #tpu.memory_space<vmem>>, vector<1x8x128xf32>
    %3 = vector.shape_cast %2 : vector<1x8x128xf32> to vector<8x128xf32>
    %c0_4 = arith.constant 0 : index
    %c16 = arith.constant 16 : index
    %c0_5 = arith.constant 0 : index
    %4 = vector.load %arg1[%c0_4, %c16, %c0_5] : memref<1x192x128xf32, #tpu.memory_space<vmem>>, vector<1x8x128xf32>
    %5 = vector.shape_cast %4 : vector<1x8x128xf32> to vector<8x128xf32>
    %c0_6 = arith.constant 0 : index
    %c24 = arith.constant 24 : index
    %c0_7 = arith.constant 0 : index
    %6 = vector.load %arg1[%c0_6, %c24, %c0_7] : memref<1x192x128xf32, #tpu.memory_space<vmem>>, vector<1x8x128xf32>
    %7 = vector.shape_cast %6 : vector<1x8x128xf32> to vector<8x128xf32>
    %c0_8 = arith.constant 0 : index
    %c32 = arith.constant 32 : index
    %c0_9 = arith.constant 0 : index
    %8 = vector.load %arg1[%c0_8, %c32, %c0_9] : memref<1x192x128xf32, #tpu.memory_space<vmem>>, vector<1x8x128xf32>
    %9 = vector.shape_cast %8 : vector<1x8x128xf32> to vector<8x128xf32>
    %c0_10 = arith.constant 0 : index
    %c40 = arith.constant 40 : index
    %c0_11 = arith.constant 0 : index
    %10 = vector.load %arg1[%c0_10, %c40, %c0_11] : memref<1x192x128xf32, #tpu.memory_space<vmem>>, vector<1x8x128xf32>
    %11 = vector.shape_cast %10 : vector<1x8x128xf32> to vector<8x128xf32>
    %c0_12 = arith.constant 0 : index
    %c48 = arith.constant 48 : index
    %c0_13 = arith.constant 0 : index
    %12 = vector.load %arg1[%c0_12, %c48, %c0_13] : memref<1x192x128xf32, #tpu.memory_space<vmem>>, vector<1x8x128xf32>
    %13 = vector.shape_cast %12 : vector<1x8x128xf32> to vector<8x128xf32>
    %c0_14 = arith.constant 0 : index
    %c56 = arith.constant 56 : index
    %c0_15 = arith.constant 0 : index
    %14 = vector.load %arg1[%c0_14, %c56, %c0_15] : memref<1x192x128xf32, #tpu.memory_space<vmem>>, vector<1x8x128xf32>
    %15 = vector.shape_cast %14 : vector<1x8x128xf32> to vector<8x128xf32>
    %c0_16 = arith.constant 0 : index
    %c64 = arith.constant 64 : index
    %c0_17 = arith.constant 0 : index
    %16 = vector.load %arg1[%c0_16, %c64, %c0_17] : memref<1x192x128xf32, #tpu.memory_space<vmem>>, vector<1x8x128xf32>
    %17 = vector.shape_cast %16 : vector<1x8x128xf32> to vector<8x128xf32>
    %c0_18 = arith.constant 0 : index
    %c72 = arith.constant 72 : index
    %c0_19 = arith.constant 0 : index
    %18 = vector.load %arg1[%c0_18, %c72, %c0_19] : memref<1x192x128xf32, #tpu.memory_space<vmem>>, vector<1x8x128xf32>
    %19 = vector.shape_cast %18 : vector<1x8x128xf32> to vector<8x128xf32>
    %c0_20 = arith.constant 0 : index
    %c80 = arith.constant 80 : index
    %c0_21 = arith.constant 0 : index
    %20 = vector.load %arg1[%c0_20, %c80, %c0_21] : memref<1x192x128xf32, #tpu.memory_space<vmem>>, vector<1x8x128xf32>
    %21 = vector.shape_cast %20 : vector<1x8x128xf32> to vector<8x128xf32>
    %c0_22 = arith.constant 0 : index
    %c88 = arith.constant 88 : index
    %c0_23 = arith.constant 0 : index
    %22 = vector.load %arg1[%c0_22, %c88, %c0_23] : memref<1x192x128xf32, #tpu.memory_space<vmem>>, vector<1x8x128xf32>
    %23 = vector.shape_cast %22 : vector<1x8x128xf32> to vector<8x128xf32>
    %c0_24 = arith.constant 0 : index
    %c96 = arith.constant 96 : index
    %c0_25 = arith.constant 0 : index
    %24 = vector.load %arg1[%c0_24, %c96, %c0_25] : memref<1x192x128xf32, #tpu.memory_space<vmem>>, vector<1x8x128xf32>
    %25 = vector.shape_cast %24 : vector<1x8x128xf32> to vector<8x128xf32>
    %c0_26 = arith.constant 0 : index
    %c104 = arith.constant 104 : index
    %c0_27 = arith.constant 0 : index
    %26 = vector.load %arg1[%c0_26, %c104, %c0_27] : memref<1x192x128xf32, #tpu.memory_space<vmem>>, vector<1x8x128xf32>
    %27 = vector.shape_cast %26 : vector<1x8x128xf32> to vector<8x128xf32>
    %c0_28 = arith.constant 0 : index
    %c112 = arith.constant 112 : index
    %c0_29 = arith.constant 0 : index
    %28 = vector.load %arg1[%c0_28, %c112, %c0_29] : memref<1x192x128xf32, #tpu.memory_space<vmem>>, vector<1x8x128xf32>
    %29 = vector.shape_cast %28 : vector<1x8x128xf32> to vector<8x128xf32>
    %c0_30 = arith.constant 0 : index
    %c120 = arith.constant 120 : index
    %c0_31 = arith.constant 0 : index
    %30 = vector.load %arg1[%c0_30, %c120, %c0_31] : memref<1x192x128xf32, #tpu.memory_space<vmem>>, vector<1x8x128xf32>
    %31 = vector.shape_cast %30 : vector<1x8x128xf32> to vector<8x128xf32>
    %c0_32 = arith.constant 0 : index
    %c128 = arith.constant 128 : index
    %c0_33 = arith.constant 0 : index
    %32 = vector.load %arg1[%c0_32, %c128, %c0_33] : memref<1x192x128xf32, #tpu.memory_space<vmem>>, vector<1x8x128xf32>
    %33 = vector.shape_cast %32 : vector<1x8x128xf32> to vector<8x128xf32>
    %c0_34 = arith.constant 0 : index
    %c136 = arith.constant 136 : index
    %c0_35 = arith.constant 0 : index
    %34 = vector.load %arg1[%c0_34, %c136, %c0_35] : memref<1x192x128xf32, #tpu.memory_space<vmem>>, vector<1x8x128xf32>
    %35 = vector.shape_cast %34 : vector<1x8x128xf32> to vector<8x128xf32>
    %c0_36 = arith.constant 0 : index
    %c144 = arith.constant 144 : index
    %c0_37 = arith.constant 0 : index
    %36 = vector.load %arg1[%c0_36, %c144, %c0_37] : memref<1x192x128xf32, #tpu.memory_space<vmem>>, vector<1x8x128xf32>
    %37 = vector.shape_cast %36 : vector<1x8x128xf32> to vector<8x128xf32>
    %c0_38 = arith.constant 0 : index
    %c152 = arith.constant 152 : index
    %c0_39 = arith.constant 0 : index
    %38 = vector.load %arg1[%c0_38, %c152, %c0_39] : memref<1x192x128xf32, #tpu.memory_space<vmem>>, vector<1x8x128xf32>
    %39 = vector.shape_cast %38 : vector<1x8x128xf32> to vector<8x128xf32>
    %c0_40 = arith.constant 0 : index
    %c160 = arith.constant 160 : index
    %c0_41 = arith.constant 0 : index
    %40 = vector.load %arg1[%c0_40, %c160, %c0_41] : memref<1x192x128xf32, #tpu.memory_space<vmem>>, vector<1x8x128xf32>
    %41 = vector.shape_cast %40 : vector<1x8x128xf32> to vector<8x128xf32>
    %c0_42 = arith.constant 0 : index
    %c168 = arith.constant 168 : index
    %c0_43 = arith.constant 0 : index
    %42 = vector.load %arg1[%c0_42, %c168, %c0_43] : memref<1x192x128xf32, #tpu.memory_space<vmem>>, vector<1x8x128xf32>
    %43 = vector.shape_cast %42 : vector<1x8x128xf32> to vector<8x128xf32>
    %c0_44 = arith.constant 0 : index
    %c176 = arith.constant 176 : index
    %c0_45 = arith.constant 0 : index
    %44 = vector.load %arg1[%c0_44, %c176, %c0_45] : memref<1x192x128xf32, #tpu.memory_space<vmem>>, vector<1x8x128xf32>
    %45 = vector.shape_cast %44 : vector<1x8x128xf32> to vector<8x128xf32>
    %c0_46 = arith.constant 0 : index
    %c184 = arith.constant 184 : index
    %c0_47 = arith.constant 0 : index
    %46 = vector.load %arg1[%c0_46, %c184, %c0_47] : memref<1x192x128xf32, #tpu.memory_space<vmem>>, vector<1x8x128xf32>
    %47 = vector.shape_cast %46 : vector<1x8x128xf32> to vector<8x128xf32>
    %48 = arith.mulf %31, %31 : vector<8x128xf32>
    %49 = arith.mulf %33, %33 : vector<8x128xf32>
    %50 = arith.addf %48, %49 : vector<8x128xf32>
    %51 = arith.mulf %35, %35 : vector<8x128xf32>
    %52 = arith.addf %50, %51 : vector<8x128xf32>
    %53 = arith.mulf %31, %37 : vector<8x128xf32>
    %54 = arith.mulf %33, %39 : vector<8x128xf32>
    %55 = arith.addf %53, %54 : vector<8x128xf32>
    %56 = arith.mulf %35, %41 : vector<8x128xf32>
    %57 = arith.addf %55, %56 : vector<8x128xf32>
    %58 = arith.mulf %31, %43 : vector<8x128xf32>
    %59 = arith.mulf %33, %45 : vector<8x128xf32>
    %60 = arith.addf %58, %59 : vector<8x128xf32>
    %61 = arith.mulf %35, %47 : vector<8x128xf32>
    %62 = arith.addf %60, %61 : vector<8x128xf32>
    %63 = arith.mulf %37, %37 : vector<8x128xf32>
    %64 = arith.mulf %39, %39 : vector<8x128xf32>
    %65 = arith.addf %63, %64 : vector<8x128xf32>
    %66 = arith.mulf %41, %41 : vector<8x128xf32>
    %67 = arith.addf %65, %66 : vector<8x128xf32>
    %68 = arith.mulf %37, %43 : vector<8x128xf32>
    %69 = arith.mulf %39, %45 : vector<8x128xf32>
    %70 = arith.addf %68, %69 : vector<8x128xf32>
    %71 = arith.mulf %41, %47 : vector<8x128xf32>
    %72 = arith.addf %70, %71 : vector<8x128xf32>
    %73 = arith.mulf %43, %43 : vector<8x128xf32>
    %74 = arith.mulf %45, %45 : vector<8x128xf32>
    %75 = arith.addf %73, %74 : vector<8x128xf32>
    %76 = arith.mulf %47, %47 : vector<8x128xf32>
    %77 = arith.addf %75, %76 : vector<8x128xf32>
    %cst = arith.constant 0.000000e+00 : f32
    %78 = vector.broadcast %cst : f32 to vector<8x128xf32>
    %79 = arith.cmpf ogt, %52, %78 : vector<8x128xf32>
    %80 = math.rsqrt %52 : vector<8x128xf32>
    %cst_48 = arith.constant 0.000000e+00 : f32
    %81 = vector.broadcast %cst_48 : f32 to vector<8x128xf32>
    %82 = arith.select %79, %80, %81 : vector<8x128xi1>, vector<8x128xf32>
    %83 = arith.mulf %1, %31 : vector<8x128xf32>
    %84 = arith.mulf %3, %33 : vector<8x128xf32>
    %85 = arith.addf %83, %84 : vector<8x128xf32>
    %86 = arith.mulf %5, %35 : vector<8x128xf32>
    %87 = arith.addf %85, %86 : vector<8x128xf32>
    %88 = arith.mulf %7, %31 : vector<8x128xf32>
    %89 = arith.mulf %9, %33 : vector<8x128xf32>
    %90 = arith.addf %88, %89 : vector<8x128xf32>
    %91 = arith.mulf %11, %35 : vector<8x128xf32>
    %92 = arith.addf %90, %91 : vector<8x128xf32>
    %93 = arith.mulf %13, %31 : vector<8x128xf32>
    %94 = arith.mulf %15, %33 : vector<8x128xf32>
    %95 = arith.addf %93, %94 : vector<8x128xf32>
    %96 = arith.mulf %17, %35 : vector<8x128xf32>
    %97 = arith.addf %95, %96 : vector<8x128xf32>
    %98 = math.absf %97 : vector<8x128xf32>
    %cst_49 = arith.constant 0.000000e+00 : f32
    %99 = vector.broadcast %cst_49 : f32 to vector<8x128xf32>
    %100 = arith.addf %99, %98 : vector<8x128xf32>
    %101 = arith.mulf %19, %31 : vector<8x128xf32>
    %102 = arith.mulf %21, %33 : vector<8x128xf32>
    %103 = arith.addf %101, %102 : vector<8x128xf32>
    %104 = arith.mulf %23, %35 : vector<8x128xf32>
    %105 = arith.addf %103, %104 : vector<8x128xf32>
    %106 = math.absf %105 : vector<8x128xf32>
    %107 = arith.addf %100, %106 : vector<8x128xf32>
    %108 = arith.mulf %25, %31 : vector<8x128xf32>
    %109 = arith.mulf %27, %33 : vector<8x128xf32>
    %110 = arith.addf %108, %109 : vector<8x128xf32>
    %111 = arith.mulf %29, %35 : vector<8x128xf32>
    %112 = arith.addf %110, %111 : vector<8x128xf32>
    %113 = math.absf %112 : vector<8x128xf32>
    %114 = arith.addf %107, %113 : vector<8x128xf32>
    %115 = math.absf %52 : vector<8x128xf32>
    %cst_50 = arith.constant 0.000000e+00 : f32
    %116 = vector.broadcast %cst_50 : f32 to vector<8x128xf32>
    %117 = arith.addf %116, %115 : vector<8x128xf32>
    %118 = math.absf %57 : vector<8x128xf32>
    %119 = arith.addf %117, %118 : vector<8x128xf32>
    %120 = math.absf %62 : vector<8x128xf32>
    %121 = arith.addf %119, %120 : vector<8x128xf32>
    %122 = arith.subf %87, %114 : vector<8x128xf32>
    %123 = arith.subf %92, %121 : vector<8x128xf32>
    %124 = arith.maximumf %122, %123 : vector<8x128xf32>
    %125 = arith.addf %87, %114 : vector<8x128xf32>
    %126 = arith.addf %92, %121 : vector<8x128xf32>
    %127 = arith.minimumf %125, %126 : vector<8x128xf32>
    %128 = arith.subf %124, %127 : vector<8x128xf32>
    %129 = arith.mulf %128, %82 : vector<8x128xf32>
    %cst_51 = arith.constant 0.000000e+00 : f32
    %130 = vector.broadcast %cst_51 : f32 to vector<8x128xf32>
    %131 = arith.cmpf ogt, %67, %130 : vector<8x128xf32>
    %132 = math.rsqrt %67 : vector<8x128xf32>
    %cst_52 = arith.constant 0.000000e+00 : f32
    %133 = vector.broadcast %cst_52 : f32 to vector<8x128xf32>
    %134 = arith.select %131, %132, %133 : vector<8x128xi1>, vector<8x128xf32>
    %135 = arith.mulf %1, %37 : vector<8x128xf32>
    %136 = arith.mulf %3, %39 : vector<8x128xf32>
    %137 = arith.addf %135, %136 : vector<8x128xf32>
    %138 = arith.mulf %5, %41 : vector<8x128xf32>
    %139 = arith.addf %137, %138 : vector<8x128xf32>
    %140 = arith.mulf %7, %37 : vector<8x128xf32>
    %141 = arith.mulf %9, %39 : vector<8x128xf32>
    %142 = arith.addf %140, %141 : vector<8x128xf32>
    %143 = arith.mulf %11, %41 : vector<8x128xf32>
    %144 = arith.addf %142, %143 : vector<8x128xf32>
    %145 = arith.mulf %13, %37 : vector<8x128xf32>
    %146 = arith.mulf %15, %39 : vector<8x128xf32>
    %147 = arith.addf %145, %146 : vector<8x128xf32>
    %148 = arith.mulf %17, %41 : vector<8x128xf32>
    %149 = arith.addf %147, %148 : vector<8x128xf32>
    %150 = math.absf %149 : vector<8x128xf32>
    %cst_53 = arith.constant 0.000000e+00 : f32
    %151 = vector.broadcast %cst_53 : f32 to vector<8x128xf32>
    %152 = arith.addf %151, %150 : vector<8x128xf32>
    %153 = arith.mulf %19, %37 : vector<8x128xf32>
    %154 = arith.mulf %21, %39 : vector<8x128xf32>
    %155 = arith.addf %153, %154 : vector<8x128xf32>
    %156 = arith.mulf %23, %41 : vector<8x128xf32>
    %157 = arith.addf %155, %156 : vector<8x128xf32>
    %158 = math.absf %157 : vector<8x128xf32>
    %159 = arith.addf %152, %158 : vector<8x128xf32>
    %160 = arith.mulf %25, %37 : vector<8x128xf32>
    %161 = arith.mulf %27, %39 : vector<8x128xf32>
    %162 = arith.addf %160, %161 : vector<8x128xf32>
    %163 = arith.mulf %29, %41 : vector<8x128xf32>
    %164 = arith.addf %162, %163 : vector<8x128xf32>
    %165 = math.absf %164 : vector<8x128xf32>
    %166 = arith.addf %159, %165 : vector<8x128xf32>
    %167 = math.absf %57 : vector<8x128xf32>
    %cst_54 = arith.constant 0.000000e+00 : f32
    %168 = vector.broadcast %cst_54 : f32 to vector<8x128xf32>
    %169 = arith.addf %168, %167 : vector<8x128xf32>
    %170 = math.absf %67 : vector<8x128xf32>
    %171 = arith.addf %169, %170 : vector<8x128xf32>
    %172 = math.absf %72 : vector<8x128xf32>
    %173 = arith.addf %171, %172 : vector<8x128xf32>
    %174 = arith.subf %139, %166 : vector<8x128xf32>
    %175 = arith.subf %144, %173 : vector<8x128xf32>
    %176 = arith.maximumf %174, %175 : vector<8x128xf32>
    %177 = arith.addf %139, %166 : vector<8x128xf32>
    %178 = arith.addf %144, %173 : vector<8x128xf32>
    %179 = arith.minimumf %177, %178 : vector<8x128xf32>
    %180 = arith.subf %176, %179 : vector<8x128xf32>
    %181 = arith.mulf %180, %134 : vector<8x128xf32>
    %cst_55 = arith.constant 0.000000e+00 : f32
    %182 = vector.broadcast %cst_55 : f32 to vector<8x128xf32>
    %183 = arith.cmpf ogt, %77, %182 : vector<8x128xf32>
    %184 = math.rsqrt %77 : vector<8x128xf32>
    %cst_56 = arith.constant 0.000000e+00 : f32
    %185 = vector.broadcast %cst_56 : f32 to vector<8x128xf32>
    %186 = arith.select %183, %184, %185 : vector<8x128xi1>, vector<8x128xf32>
    %187 = arith.mulf %1, %43 : vector<8x128xf32>
    %188 = arith.mulf %3, %45 : vector<8x128xf32>
    %189 = arith.addf %187, %188 : vector<8x128xf32>
    %190 = arith.mulf %5, %47 : vector<8x128xf32>
    %191 = arith.addf %189, %190 : vector<8x128xf32>
    %192 = arith.mulf %7, %43 : vector<8x128xf32>
    %193 = arith.mulf %9, %45 : vector<8x128xf32>
    %194 = arith.addf %192, %193 : vector<8x128xf32>
    %195 = arith.mulf %11, %47 : vector<8x128xf32>
    %196 = arith.addf %194, %195 : vector<8x128xf32>
    %197 = arith.mulf %13, %43 : vector<8x128xf32>
    %198 = arith.mulf %15, %45 : vector<8x128xf32>
    %199 = arith.addf %197, %198 : vector<8x128xf32>
    %200 = arith.mulf %17, %47 : vector<8x128xf32>
    %201 = arith.addf %199, %200 : vector<8x128xf32>
    %202 = math.absf %201 : vector<8x128xf32>
    %cst_57 = arith.constant 0.000000e+00 : f32
    %203 = vector.broadcast %cst_57 : f32 to vector<8x128xf32>
    %204 = arith.addf %203, %202 : vector<8x128xf32>
    %205 = arith.mulf %19, %43 : vector<8x128xf32>
    %206 = arith.mulf %21, %45 : vector<8x128xf32>
    %207 = arith.addf %205, %206 : vector<8x128xf32>
    %208 = arith.mulf %23, %47 : vector<8x128xf32>
    %209 = arith.addf %207, %208 : vector<8x128xf32>
    %210 = math.absf %209 : vector<8x128xf32>
    %211 = arith.addf %204, %210 : vector<8x128xf32>
    %212 = arith.mulf %25, %43 : vector<8x128xf32>
    %213 = arith.mulf %27, %45 : vector<8x128xf32>
    %214 = arith.addf %212, %213 : vector<8x128xf32>
    %215 = arith.mulf %29, %47 : vector<8x128xf32>
    %216 = arith.addf %214, %215 : vector<8x128xf32>
    %217 = math.absf %216 : vector<8x128xf32>
    %218 = arith.addf %211, %217 : vector<8x128xf32>
    %219 = math.absf %62 : vector<8x128xf32>
    %cst_58 = arith.constant 0.000000e+00 : f32
    %220 = vector.broadcast %cst_58 : f32 to vector<8x128xf32>
    %221 = arith.addf %220, %219 : vector<8x128xf32>
    %222 = math.absf %72 : vector<8x128xf32>
    %223 = arith.addf %221, %222 : vector<8x128xf32>
    %224 = math.absf %77 : vector<8x128xf32>
    %225 = arith.addf %223, %224 : vector<8x128xf32>
    %226 = arith.subf %191, %218 : vector<8x128xf32>
    %227 = arith.subf %196, %225 : vector<8x128xf32>
    %228 = arith.maximumf %226, %227 : vector<8x128xf32>
    %229 = arith.addf %191, %218 : vector<8x128xf32>
    %230 = arith.addf %196, %225 : vector<8x128xf32>
    %231 = arith.minimumf %229, %230 : vector<8x128xf32>
    %232 = arith.subf %228, %231 : vector<8x128xf32>
    %233 = arith.mulf %232, %186 : vector<8x128xf32>
    %cst_59 = arith.constant 0.000000e+00 : f32
    %234 = vector.broadcast %cst_59 : f32 to vector<8x128xf32>
    %235 = arith.cmpf oge, %129, %234 : vector<8x128xf32>
    %cst_60 = arith.constant 0.000000e+00 : f32
    %236 = vector.broadcast %cst_60 : f32 to vector<8x128xf32>
    %237 = arith.cmpf oge, %181, %236 : vector<8x128xf32>
    %238 = arith.ori %235, %237 : vector<8x128xi1>
    %cst_61 = arith.constant 0.000000e+00 : f32
    %239 = vector.broadcast %cst_61 : f32 to vector<8x128xf32>
    %240 = arith.cmpf oge, %233, %239 : vector<8x128xf32>
    %241 = arith.ori %238, %240 : vector<8x128xi1>
    %242 = arith.maximumf %129, %181 : vector<8x128xf32>
    %243 = arith.maximumf %242, %233 : vector<8x128xf32>
    %cst_62 = arith.constant -5.000000e+00 : f32
    %244 = vector.broadcast %cst_62 : f32 to vector<8x128xf32>
    %245 = arith.mulf %243, %244 : vector<8x128xf32>
    %cst_63 = arith.constant 0.000000e+00 : f32
    %246 = vector.broadcast %cst_63 : f32 to vector<8x128xf32>
    %247 = arith.select %241, %246, %245 : vector<8x128xi1>, vector<8x128xf32>
    %c0_64 = arith.constant 0 : index
    %c0_65 = arith.constant 0 : index
    %c0_66 = arith.constant 0 : index
    %248 = vector.load %arg2[%c0_64, %c0_65, %c0_66] : memref<1x8x128xf32, #tpu.memory_space<vmem>>, vector<1x8x128xf32>
    %249 = vector.shape_cast %248 : vector<1x8x128xf32> to vector<8x128xf32>
    %250 = vector.shape_cast %247 : vector<8x128xf32> to vector<1x8x128xf32>
    tpu.vector_store %arg2[%c0_64, %c0_65, %c0_66], %250 {strides = array<i32>} : memref<1x8x128xf32, #tpu.memory_space<vmem>>, vector<1x8x128xf32>,
    return
  }
  func.func @transform_0(%arg0: i32) -> (i32, i32, i32) {
    %c0_i32 = arith.constant 0 : i32
    %c0_i32_0 = arith.constant 0 : i32
    %c0_i32_1 = arith.constant 0 : i32
    return %arg0, %c0_i32, %c0_i32_0 : i32, i32, i32
  }
  func.func @transform_1(%arg0: i32) -> (i32, i32, i32) {
    %c0_i32 = arith.constant 0 : i32
    %c0_i32_0 = arith.constant 0 : i32
    %c0_i32_1 = arith.constant 0 : i32
    return %arg0, %c0_i32, %c0_i32_0 : i32, i32, i32
  }
}

</mosaic_0001>

<llo_original>
// kernel: collision_penalty_batch.1
$region0: #{collision_penalty_batch.1}
  #allocation0 [shape = 'u32[]', space=smem, size = 0x4, offset = 0x4, fixed_abs, tag = 'smem constant byte address 0x4 - core index']
  #allocation1 [shape = 'u32[144,128]{1,0:T(1,128)}', space=vmem, size = 0x12000, scoped, tag = 'internal scratch']
  %s0 = inlined_call_operand.vmem [shape: f32[1,192,128], index: 0, kind: input, shape index: {}]
  %s1 = inlined_call_operand.vmem [shape: f32[1,8,128], index: 1, kind: output, shape index: {}]
  %s2 = sld [smem:[#allocation0]]
  $region14: #{collision_penalty_batch.1} parent=0
    _
  %s4 = ssub.s32 1, %s2
  %s5 = scalar_select 0, %s4, %s2
  // Predicated region
  $region2: #{collision_penalty_batch.1} parent=0 // pred_check
    _
  $region3: #{collision_penalty_batch.1} parent=0 // pred_check_branch
    %7 = sbr.rel (0) target = $region5
  $region4: #{collision_penalty_batch.1} parent=0 // pred_region
    _
  $region5: #{collision_penalty_batch.1} parent=0 // pred_fallthru
    _
  %v8 = vld [vmem:[%s0] sm:$0xff]
  %v9 = vld [vmem:[%s0 + $0x8] sm:$0xff]
  %v10 = vld [vmem:[%s0 + $0x10] sm:$0xff]
  %v11 = vld [vmem:[%s0 + $0x18] sm:$0xff]
  %v12 = vld [vmem:[%s0 + $0x20] sm:$0xff]
  %v13 = vld [vmem:[%s0 + $0x28] sm:$0xff]
  %v14 = vld [vmem:[%s0 + $0x30] sm:$0xff]
  %v15 = vld [vmem:[%s0 + $0x38] sm:$0xff]
  %v16 = vld [vmem:[%s0 + $0x40] sm:$0xff]
  %v17 = vld [vmem:[%s0 + $0x48] sm:$0xff]
  %v18 = vld [vmem:[%s0 + $0x50] sm:$0xff]
  %v19 = vld [vmem:[%s0 + $0x58] sm:$0xff]
  %v20 = vld [vmem:[%s0 + $0x60] sm:$0xff]
  %v21 = vld [vmem:[%s0 + $0x68] sm:$0xff]
  %v22 = vld [vmem:[%s0 + $0x70] sm:$0xff]
  %v23 = vld [vmem:[%s0 + $0x78] sm:$0xff]
  %v24 = vld [vmem:[%s0 + $0x80] sm:$0xff]
  %v25 = vld [vmem:[%s0 + $0x88] sm:$0xff]
  %v26 = vld [vmem:[%s0 + $0x90] sm:$0xff]
  %v27 = vld [vmem:[%s0 + $0x98] sm:$0xff]
  %v28 = vld [vmem:[%s0 + $0xa0] sm:$0xff]
  %v29 = vld [vmem:[%s0 + $0xa8] sm:$0xff]
  %v30 = vld [vmem:[%s0 + $0xb0] sm:$0xff]
  %v31 = vld [vmem:[%s0 + $0xb8] sm:$0xff]
  %v32 = vmul.f32 %v23, %v23
  %v33 = vmul.f32 %v24, %v24
  %v34 = vadd.f32 %v32, %v33
  %v35 = vmul.f32 %v25, %v25
  %v36 = vadd.f32 %v34, %v35
  %v37 = vmul.f32 %v23, %v26
  %v38 = vmul.f32 %v24, %v27
  %v39 = vadd.f32 %v37, %v38
  %v40 = vmul.f32 %v25, %v28
  %v41 = vadd.f32 %v39, %v40
  %v42 = vmul.f32 %v23, %v29
  %v43 = vmul.f32 %v24, %v30
  %v44 = vadd.f32 %v42, %v43
  %v45 = vmul.f32 %v25, %v31
  %v46 = vadd.f32 %v44, %v45
  %v47 = vmul.f32 %v26, %v26
  %v48 = vmul.f32 %v27, %v27
  %v49 = vadd.f32 %v47, %v48
  %v50 = vmul.f32 %v28, %v28
  %v51 = vadd.f32 %v49, %v50
  %v52 = vmul.f32 %v26, %v29
  %v53 = vmul.f32 %v27, %v30
  %v54 = vadd.f32 %v52, %v53
  %v55 = vmul.f32 %v28, %v31
  %v56 = vadd.f32 %v54, %v55
  %v57 = vmul.f32 %v29, %v29
  %v58 = vmul.f32 %v30, %v30
  %v59 = vadd.f32 %v57, %v58
  %v60 = vmul.f32 %v31, %v31
  %v61 = vadd.f32 %v59, %v60
  %vm62 = vcmp.gt.f32.partialorder %v36, 0.0
  %v63 = vrsqrt.pop %v36
  %v64 = vsel %vm62, %v63, 0.0
  %v65 = vmul.f32 %v8, %v23
  %v66 = vmul.f32 %v9, %v24
  %v67 = vadd.f32 %v65, %v66
  %v68 = vmul.f32 %v10, %v25
  %v69 = vadd.f32 %v67, %v68
  %v70 = vmul.f32 %v11, %v23
  %v71 = vmul.f32 %v12, %v24
  %v72 = vadd.f32 %v70, %v71
  %v73 = vmul.f32 %v13, %v25
  %v74 = vadd.f32 %v72, %v73
  %v75 = vmul.f32 %v14, %v23
  %v76 = vmul.f32 %v15, %v24
  %v77 = vadd.f32 %v75, %v76
  %v78 = vmul.f32 %v16, %v25
  %v79 = vadd.f32 %v77, %v78
  %v80 = vand.u32 2147483647, %v79
  %v81 = vadd.f32 %v80, 0.0
  %v82 = vmul.f32 %v17, %v23
  %v83 = vmul.f32 %v18, %v24
  %v84 = vadd.f32 %v82, %v83
  %v85 = vmul.f32 %v19, %v25
  %v86 = vadd.f32 %v84, %v85
  %v87 = vand.u32 2147483647, %v86
  %v88 = vadd.f32 %v81, %v87
  %v89 = vmul.f32 %v20, %v23
  %v90 = vmul.f32 %v21, %v24
  %v91 = vadd.f32 %v89, %v90
  %v92 = vmul.f32 %v22, %v25
  %v93 = vadd.f32 %v91, %v92
  %v94 = vand.u32 2147483647, %v93
  %v95 = vadd.f32 %v88, %v94
  %v96 = vand.u32 2147483647, %v36
  %v97 = vadd.f32 %v96, 0.0
  %v98 = vand.u32 2147483647, %v41
  %v99 = vadd.f32 %v97, %v98
  %v100 = vand.u32 2147483647, %v46
  %v101 = vadd.f32 %v99, %v100
  %v102 = vsub.f32 %v69, %v95
  %v103 = vsub.f32 %v74, %v101
  %v104 = vmax.f32 %v102, %v103
  %v105 = vadd.f32 %v69, %v95
  %v106 = vadd.f32 %v74, %v101
  %v107 = vmin.f32 %v105, %v106
  %v108 = vsub.f32 %v104, %v107
  %v109 = vmul.f32 %v108, %v64
  %vm110 = vcmp.gt.f32.partialorder %v51, 0.0
  %v111 = vrsqrt.pop %v51
  %v112 = vsel %vm110, %v111, 0.0
  %v113 = vmul.f32 %v8, %v26
  %v114 = vmul.f32 %v9, %v27
  %v115 = vadd.f32 %v113, %v114
  %v116 = vmul.f32 %v10, %v28
  %v117 = vadd.f32 %v115, %v116
  %v118 = vmul.f32 %v11, %v26
  %v119 = vmul.f32 %v12, %v27
  %v120 = vadd.f32 %v118, %v119
  %v121 = vmul.f32 %v13, %v28
  %v122 = vadd.f32 %v120, %v121
  %v123 = vmul.f32 %v14, %v26
  %v124 = vmul.f32 %v15, %v27
  %v125 = vadd.f32 %v123, %v124
  %v126 = vmul.f32 %v16, %v28
  %v127 = vadd.f32 %v125, %v126
  %v128 = vand.u32 2147483647, %v127
  %v129 = vadd.f32 %v128, 0.0
  %v130 = vmul.f32 %v17, %v26
  %v131 = vmul.f32 %v18, %v27
  %v132 = vadd.f32 %v130, %v131
  %v133 = vmul.f32 %v19, %v28
  %v134 = vadd.f32 %v132, %v133
  %v135 = vand.u32 2147483647, %v134
  %v136 = vadd.f32 %v129, %v135
  %v137 = vmul.f32 %v20, %v26
  %v138 = vmul.f32 %v21, %v27
  %v139 = vadd.f32 %v137, %v138
  %v140 = vmul.f32 %v22, %v28
  %v141 = vadd.f32 %v139, %v140
  %v142 = vand.u32 2147483647, %v141
  %v143 = vadd.f32 %v136, %v142
  %v144 = vadd.f32 %v98, 0.0
  %v145 = vand.u32 2147483647, %v51
  %v146 = vadd.f32 %v144, %v145
  %v147 = vand.u32 2147483647, %v56
  %v148 = vadd.f32 %v146, %v147
  %v149 = vsub.f32 %v117, %v143
  %v150 = vsub.f32 %v122, %v148
  %v151 = vmax.f32 %v149, %v150
  %v152 = vadd.f32 %v117, %v143
  %v153 = vadd.f32 %v122, %v148
  %v154 = vmin.f32 %v152, %v153
  %v155 = vsub.f32 %v151, %v154
  %v156 = vmul.f32 %v155, %v112
  %vm157 = vcmp.gt.f32.partialorder %v61, 0.0
  %v158 = vrsqrt.pop %v61
  %v159 = vsel %vm157, %v158, 0.0
  %v160 = vmul.f32 %v8, %v29
  %v161 = vmul.f32 %v9, %v30
  %v162 = vadd.f32 %v160, %v161
  %v163 = vmul.f32 %v10, %v31
  %v164 = vadd.f32 %v162, %v163
  %v165 = vmul.f32 %v11, %v29
  %v166 = vmul.f32 %v12, %v30
  %v167 = vadd.f32 %v165, %v166
  %v168 = vmul.f32 %v13, %v31
  %v169 = vadd.f32 %v167, %v168
  %v170 = vmul.f32 %v14, %v29
  %v171 = vmul.f32 %v15, %v30
  %v172 = vadd.f32 %v170, %v171
  %v173 = vmul.f32 %v16, %v31
  %v174 = vadd.f32 %v172, %v173
  %v175 = vand.u32 2147483647, %v174
  %v176 = vadd.f32 %v175, 0.0
  %v177 = vmul.f32 %v17, %v29
  %v178 = vmul.f32 %v18, %v30
  %v179 = vadd.f32 %v177, %v178
  %v180 = vmul.f32 %v19, %v31
  %v181 = vadd.f32 %v179, %v180
  %v182 = vand.u32 2147483647, %v181
  %v183 = vadd.f32 %v176, %v182
  %v184 = vmul.f32 %v20, %v29
  %v185 = vmul.f32 %v21, %v30
  %v186 = vadd.f32 %v184, %v185
  %v187 = vmul.f32 %v22, %v31
  %v188 = vadd.f32 %v186, %v187
  %v189 = vand.u32 2147483647, %v188
  %v190 = vadd.f32 %v183, %v189
  %v191 = vadd.f32 %v100, 0.0
  %v192 = vadd.f32 %v191, %v147
  %v193 = vand.u32 2147483647, %v61
  %v194 = vadd.f32 %v192, %v193
  %v195 = vsub.f32 %v164, %v190
  %v196 = vsub.f32 %v169, %v194
  %v197 = vmax.f32 %v195, %v196
  %v198 = vadd.f32 %v164, %v190
  %v199 = vadd.f32 %v169, %v194
  %v200 = vmin.f32 %v198, %v199
  %v201 = vsub.f32 %v197, %v200
  %v202 = vmul.f32 %v201, %v159
  %vm203 = vcmp.ge.f32.partialorder %v109, 0.0
  %vm204 = vcmp.ge.f32.partialorder %v156, 0.0
  %vm205 = vmor %vm203, %vm204
  %vm206 = vcmp.ge.f32.partialorder %v202, 0.0
  %vm207 = vmor %vm205, %vm206
  %v208 = vmax.f32 %v109, %v156
  %v209 = vmax.f32 %v208, %v202
  %v210 = vmul.f32 %v209, -5.0
  %v211 = vsel %vm207, 0.0, %v210
  %212 = vst [vmem:[%s1] sm:$0xff] %v211
  // Predicated region
  $region6: #{collision_penalty_batch.1} parent=0 // pred_check
    _
  $region7: #{collision_penalty_batch.1} parent=0 // pred_check_branch
    %214 = sbr.rel (0) target = $region9
  $region8: #{collision_penalty_batch.1} parent=0 // pred_region
    _
  $region9: #{collision_penalty_batch.1} parent=0 // pred_fallthru
    _
  // Predicated region
  $region10: #{collision_penalty_batch.1} parent=0 // pred_check
    _
  $region11: #{collision_penalty_batch.1} parent=0 // pred_check_branch
    %216 = sbr.rel (0) target = $region13
  $region12: #{collision_penalty_batch.1} parent=0 // pred_region
    _
  $region13: #{collision_penalty_batch.1} parent=0 // pred_fallthru
    _

</llo_original>
